<compile_context>
chip_gen: v5e
topology: v5e:2x2
jax: 0.10.0
libtpu: 0.0.40
codegen_flags: <defaults>
</compile_context>

<pallas_src>
import math

import jax
import jax.numpy as jnp
from jax import lax
from jax.experimental import pallas as pl
from jax.experimental.pallas import tpu as pltpu


def _round_up(x, m):
    return ((x + m - 1) // m) * m


def _pick_tile(total, preferred, align):
    """Largest multiple of `align` that divides `total`, capped at `preferred`."""
    if total <= preferred:
        return total
    best = align
    t = align
    cap = min(total, preferred)
    while t <= cap:
        if total % t == 0:
            best = t
        t += align
    return best


def _proj_kernel_cached(x_ref, w_ref, b_ref, o_ref, m_ref, l_ref, lse_ref, cache_ref):
    """grid = (row_tiles, 2, vocab_tiles).

    p == 0: logits tile on the MXU -> VMEM cache + online max / sum-exp.
    p == 1: read cached tile, write logits - lse (no matmul, no weight DMA).
    """
    p = pl.program_id(1)           # 0 = compute/stats pass, 1 = write pass
    j = pl.program_id(2)           # vocab tile index
    nj = pl.num_programs(2)

    @pl.when(p == 0)
    def _pass0():
        # (tm, tn) logits: contract last dims of x (tm, d) and weight tile (tn, d)
        # in native PyTorch layout; f32 accumulation on the MXU.
        logits = lax.dot_general(
            x_ref[...], w_ref[...],
            dimension_numbers=(((1,), (1,)), ((), ())),
            preferred_element_type=jnp.float32) + b_ref[...]
        cache_ref[j] = logits.astype(cache_ref.dtype)

        @pl.when(j == 0)
        def _init():
            m_ref[...] = jnp.full(m_ref.shape, -jnp.inf, m_ref.dtype)
            l_ref[...] = jnp.zeros(l_ref.shape, l_ref.dtype)

        m_prev = m_ref[...]
        m_new = jnp.maximum(m_prev, jnp.max(logits, axis=-1, keepdims=True))
        alpha = jnp.exp(m_prev - m_new)
        l_ref[...] = alpha * l_ref[...] + jnp.sum(
            jnp.exp(logits - m_new), axis=-1, keepdims=True)
        m_ref[...] = m_new

        @pl.when(j == nj - 1)
        def _finalize_lse():
            lse_ref[...] = m_ref[...] + jnp.log(l_ref[...])

    @pl.when(p == 1)
    def _pass1():
        o_ref[...] = (cache_ref[j].astype(jnp.float32) - lse_ref[...]).astype(o_ref.dtype)


def _proj_kernel_recompute(x_ref, w_ref, b_ref, o_ref, m_ref, l_ref, lse_ref):
    """Fallback when the logits cache does not fit VMEM: the matmul is recomputed in
    pass 1.  The wrapper walks the vocab tiles in reverse during pass 1 (via the weight /
    bias / output index maps) so the weight tile at the pass boundary is reused."""
    p = pl.program_id(1)
    j = pl.program_id(2)
    nj = pl.num_programs(2)

    logits = lax.dot_general(
        x_ref[...], w_ref[...],
        dimension_numbers=(((1,), (1,)), ((), ())),
        preferred_element_type=jnp.float32) + b_ref[...]

    @pl.when(p == 0)
    def _pass0():
        @pl.when(j == 0)
        def _init():
            m_ref[...] = jnp.full(m_ref.shape, -jnp.inf, m_ref.dtype)
            l_ref[...] = jnp.zeros(l_ref.shape, l_ref.dtype)

        m_prev = m_ref[...]
        m_new = jnp.maximum(m_prev, jnp.max(logits, axis=-1, keepdims=True))
        alpha = jnp.exp(m_prev - m_new)
        l_ref[...] = alpha * l_ref[...] + jnp.sum(
            jnp.exp(logits - m_new), axis=-1, keepdims=True)
        m_ref[...] = m_new

        @pl.when(j == nj - 1)
        def _finalize_lse():
            lse_ref[...] = m_ref[...] + jnp.log(l_ref[...])

    @pl.when(p == 1)
    def _pass1():
        o_ref[...] = (logits - lse_ref[...]).astype(o_ref.dtype)


def projection_layer(x, weight, bias, *, tm=512, tn=1024,
                     compute_dtype=jnp.bfloat16, out_dtype=jnp.float32,
                     vmem_cap_bytes=56 * 1024 * 1024):
    """x: (B, S, d_model); weight: (vocab, d_model) (PyTorch Linear layout); bias: (vocab,).

    Returns (B, S, vocab) log-probabilities = log_softmax(x @ weight.T + bias, axis=-1).
    Pass `weight` already cast to `compute_dtype` to avoid a per-call HBM cast copy.
    """
    B, S, d_model = x.shape
    vocab, d_model_w = weight.shape
    assert d_model_w == d_model
    assert vocab % 128 == 0, "vocab must be a multiple of the 128-lane width"

    M = B * S
    M8 = _round_up(M, 8)

    # Row tile: prefer a divisor of the 8-aligned row count (avoids an (M_pad, vocab)
    # pad + slice copy of the output); only pad further if the best divisor is tiny.
    tm_req = max(8, _round_up(min(tm, M8), 8))
    tm_eff = _pick_tile(M8, tm_req, 8)
    if tm_eff < min(tm_req, 128) and M8 > 4 * tm_req:
        tm_eff = tm_req
        M_pad = _round_up(M8, tm_eff)
    else:
        M_pad = M8

    tn_req = max(128, _round_up(min(tn, vocab), 128))
    tn_eff = _pick_tile(vocab, tn_req, 128)
    nj = vocab // tn_eff
    last_j = nj - 1
    n_rows = M_pad // tm_eff

    x2 = x.reshape(M, d_model).astype(compute_dtype)
    if M_pad != M:
        x2 = jnp.pad(x2, ((0, M_pad - M), (0, 0)))
    w = weight if weight.dtype == compute_dtype else weight.astype(compute_dtype)
    b2 = bias.astype(jnp.float32).reshape(1, vocab)

    itemsize = jnp.dtype(compute_dtype).itemsize
    out_itemsize = jnp.dtype(out_dtype).itemsize

    def vmem_need(cache_bytes_per_elem):
        return (2 * tm_eff * d_model * itemsize          # x tile (double-buffered)
                + 2 * tn_eff * d_model * itemsize        # weight tile
                + 2 * tn_eff * 4                         # bias tile
                + 2 * tm_eff * tn_eff * out_itemsize     # output tile
                + 3 * tm_eff * 4 * 128                   # stats scratch (lane padded)
                + tm_eff * vocab * cache_bytes_per_elem) # logits cache (0 => none)

    # Pick the cheapest scheme that fits the VMEM cap: f32 cache > bf16 cache > recompute.
    if vmem_need(4) <= vmem_cap_bytes * 3 // 4:
        use_cache, cache_dtype = True, jnp.float32
    elif vmem_need(2) <= vmem_cap_bytes * 3 // 4:
        use_cache, cache_dtype = True, jnp.bfloat16
    else:
        use_cache, cache_dtype = False, None

    stats_scratch = [pltpu.VMEM((tm_eff, 1), jnp.float32)] * 3   # running max / sum / lse

    if use_cache:
        kernel = _proj_kernel_cached
        # Pass 1 never touches the weight/bias: pin their block index to the last
        # pass-0 tile so no DMAs are issued during pass 1.
        w_map = lambda i, p, j: ((1 - p) * j + p * last_j, 0)
        b_map = lambda i, p, j: (0, (1 - p) * j + p * last_j)
        # Output revisit trick: during pass 0 the block index stays (i, 0), so the
        # (unwritten) output buffer is never flushed; pass 1 starts on the same block
        # (i, 0), writes it, and each subsequent block change flushes a written buffer.
        out_map = lambda i, p, j: (i, p * j)
        scratch = stats_scratch + [pltpu.VMEM((nj, tm_eff, tn_eff), cache_dtype)]
        need = vmem_need(jnp.dtype(cache_dtype).itemsize)
        flops = 2 * M_pad * d_model * vocab
        weight_bytes = n_rows * vocab * d_model * itemsize
    else:
        kernel = _proj_kernel_recompute
        # Pass 1 walks the vocab tiles in reverse so the weight tile at the pass
        # boundary (last_j) is reused instead of re-fetched.
        w_map = lambda i, p, j: ((1 - p) * j + p * (last_j - j), 0)
        b_map = lambda i, p, j: (0, (1 - p) * j + p * (last_j - j))
        # Pass 0 pins the output block to (i, last_j); pass 1 writes that block first
        # (reverse traversal), so no unwritten buffer is ever flushed.
        out_map = lambda i, p, j: (i, (1 - p) * last_j + p * (last_j - j))
        scratch = stats_scratch
        need = vmem_need(0)
        flops = 2 * 2 * M_pad * d_model * vocab
        weight_bytes = 2 * n_rows * vocab * d_model * itemsize

    vmem_limit = int(min(vmem_cap_bytes, max(2 * need, 8 * 1024 * 1024)))

    cost = pl.CostEstimate(
        flops=flops,
        transcendentals=M_pad * vocab + 2 * M_pad,
        bytes_accessed=(M_pad * d_model * itemsize
                        + weight_bytes
                        + n_rows * vocab * 4
                        + M_pad * vocab * out_itemsize),
    )

    out2 = pl.pallas_call(
        kernel,
        out_shape=jax.ShapeDtypeStruct((M_pad, vocab), out_dtype),
        grid_spec=pltpu.PrefetchScalarGridSpec(
            num_scalar_prefetch=0,
            grid=(n_rows, 2, nj),
            in_specs=[
                pl.BlockSpec((tm_eff, d_model), lambda i, p, j: (i, 0)),
                pl.BlockSpec((tn_eff, d_model), w_map),
                pl.BlockSpec((1, tn_eff), b_map),
            ],
            out_specs=pl.BlockSpec((tm_eff, tn_eff), out_map),
            scratch_shapes=scratch,
        ),
        compiler_params=pltpu.CompilerParams(
            dimension_semantics=("parallel", "arbitrary", "arbitrary"),
            vmem_limit_bytes=vmem_limit,
        ),
        cost_estimate=cost,
    )(x2, w, b2)

    if M_pad != M:
        out2 = out2[:M]
    return out2.reshape(B, S, vocab)


if __name__ == "__main__":
    # Small shapes consistent with the module: (batch=2, seq=8, d_model=32), vocab=1024
    # (multiple of 128).  tn=256 so the vocab grid axis has 4 tiles and the logits-cache
    # indexing is exercised.
    B, S, d_model, vocab = 2, 8, 32, 1024

    key = jax.random.PRNGKey(0)
    kx, kw, kb = jax.random.split(key, 3)

    x = jax.random.normal(kx, (B, S, d_model), dtype=jnp.float32)
    # Deterministic init mimicking nn.Linear's uniform(-1/sqrt(d_model), 1/sqrt(d_model)).
    bound = 1.0 / math.sqrt(d_model)
    weight = jax.random.uniform(kw, (vocab, d_model), jnp.float32, -bound, bound)
    bias = jax.random.uniform(kb, (vocab,), jnp.float32, -bound, bound)

    # Hoist the bf16 cast of the (static) projection weight out of the call path.
    weight_bf16 = weight.astype(jnp.bfloat16)

    out = projection_layer(x, weight_bf16, bias, tm=128, tn=256)
    jax.block_until_ready(out)

    assert out.shape == (B, S, vocab)
    assert out.dtype == jnp.float32

    # Reference with the same bf16-input / f32-accumulate matmul precision as the kernel.
    logits_ref = lax.dot_general(
        x.astype(jnp.bfloat16), weight_bf16,
        dimension_numbers=(((2,), (1,)), ((), ())),
        preferred_element_type=jnp.float32) + bias
    ref = jax.nn.log_softmax(logits_ref, axis=-1)
    assert jnp.allclose(out, ref, atol=2e-3, rtol=2e-3), float(jnp.max(jnp.abs(out - ref)))

    # Full-f32 reference with a looser tolerance (bf16 MXU inputs).
    ref_f32 = jax.nn.log_softmax(x @ weight.T + bias, axis=-1)
    assert jnp.allclose(out, ref_f32, atol=5e-2, rtol=5e-2)

    print("KERNEL_OK")
</pallas_src>

<mosaic_0001>
module attributes {stable_mosaic.version = 11 : i64} {
  func.func @_proj_kernel_cached(%arg0: i32, %arg1: i32, %arg2: i32, %arg3: memref<16x32xbf16, #tpu.memory_space<vmem>>, %arg4: memref<256x32xbf16, #tpu.memory_space<vmem>>, %arg5: memref<1x256xf32, #tpu.memory_space<vmem>>, %arg6: memref<16x256xf32, #tpu.memory_space<vmem>>, %arg7: memref<16x1xf32, #tpu.memory_space<vmem>>, %arg8: memref<16x1xf32, #tpu.memory_space<vmem>>, %arg9: memref<16x1xf32, #tpu.memory_space<vmem>>, %arg10: memref<4x16x256xf32, #tpu.memory_space<vmem>>) attributes {dimension_semantics = [#tpu.dimension_semantics<parallel>, #tpu.dimension_semantics<arbitrary>, #tpu.dimension_semantics<arbitrary>], iteration_bounds = array<i64: 1, 2, 4>, scalar_prefetch = 0 : i64, scratch_operands = 4 : i64, tpu.core_type = #tpu.core_type<tc>, window_params = [{transform_indices = @transform_0, window_bounds = array<i64: 16, 32>}, {transform_indices = @transform_1, window_bounds = array<i64: 256, 32>}, {transform_indices = @transform_2, window_bounds = array<i64: 1, 256>}, {transform_indices = @transform_3, window_bounds = array<i64: 16, 256>}]} {
    %c0_i32 = arith.constant 0 : i32
    %0 = arith.cmpi eq, %arg1, %c0_i32 : i32
    %1 = arith.extui %0 : i1 to i32
    %c0_i32_0 = arith.constant 0 : i32
    %2 = arith.cmpi ne, %1, %c0_i32_0 : i32
    scf.if %2 {
      %c0 = arith.constant 0 : index
      %c0_2 = arith.constant 0 : index
      %6 = vector.load %arg3[%c0, %c0_2] : memref<16x32xbf16, #tpu.memory_space<vmem>>, vector<16x32xbf16>
      %c0_3 = arith.constant 0 : index
      %c0_4 = arith.constant 0 : index
      %7 = vector.load %arg4[%c0_3, %c0_4] : memref<256x32xbf16, #tpu.memory_space<vmem>>, vector<256x32xbf16>
      %cst = arith.constant dense<0.000000e+00> : vector<16x256xf32>
      %8 = tpu.matmul %6, %7, %cst {dimension_numbers = #tpu.dot_dimension_numbers<[1], [1], [0], [0], [0, 0, 1, 0], [], []>} : vector<16x32xbf16>, vector<256x32xbf16>, vector<16x256xf32> -> vector<16x256xf32>
      %c0_5 = arith.constant 0 : index
      %c0_6 = arith.constant 0 : index
      %9 = vector.load %arg5[%c0_5, %c0_6] : memref<1x256xf32, #tpu.memory_space<vmem>>, vector<1x256xf32>
      %10 = vector.broadcast %9 : vector<1x256xf32> to vector<16x256xf32>
      %11 = arith.addf %8, %10 : vector<16x256xf32>
      %12 = arith.index_cast %arg2 : i32 to index
      %c0_7 = arith.constant 0 : index
      %c0_8 = arith.constant 0 : index
      %13 = vector.load %arg10[%12, %c0_7, %c0_8] : memref<4x16x256xf32, #tpu.memory_space<vmem>>, vector<1x16x256xf32>
      %14 = vector.shape_cast %13 : vector<1x16x256xf32> to vector<16x256xf32>
      %15 = vector.shape_cast %11 : vector<16x256xf32> to vector<1x16x256xf32>
      tpu.vector_store %arg10[%12, %c0_7, %c0_8], %15 {strides = array<i32>} : memref<4x16x256xf32, #tpu.memory_space<vmem>>, vector<1x16x256xf32>,
      %c0_i32_9 = arith.constant 0 : i32
      %16 = arith.cmpi eq, %arg2, %c0_i32_9 : i32
      %17 = arith.extui %16 : i1 to i32
      %c0_i32_10 = arith.constant 0 : i32
      %18 = arith.cmpi ne, %17, %c0_i32_10 : i32
      scf.if %18 {
        %cst_22 = arith.constant 0xFF800000 : f32
        %38 = vector.broadcast %cst_22 : f32 to vector<16x1xf32>
        %c0_23 = arith.constant 0 : index
        %c0_24 = arith.constant 0 : index
        %39 = vector.load %arg7[%c0_23, %c0_24] : memref<16x1xf32, #tpu.memory_space<vmem>>, vector<16x1xf32>
        tpu.vector_store %arg7[%c0_23, %c0_24], %38 {strides = array<i32>} : memref<16x1xf32, #tpu.memory_space<vmem>>, vector<16x1xf32>,
        %cst_25 = arith.constant 0.000000e+00 : f32
        %40 = vector.broadcast %cst_25 : f32 to vector<16x1xf32>
        %c0_26 = arith.constant 0 : index
        %c0_27 = arith.constant 0 : index
        %41 = vector.load %arg8[%c0_26, %c0_27] : memref<16x1xf32, #tpu.memory_space<vmem>>, vector<16x1xf32>
        tpu.vector_store %arg8[%c0_26, %c0_27], %40 {strides = array<i32>} : memref<16x1xf32, #tpu.memory_space<vmem>>, vector<16x1xf32>,
      } else {
      }
      %c0_11 = arith.constant 0 : index
      %c0_12 = arith.constant 0 : index
      %19 = vector.load %arg7[%c0_11, %c0_12] : memref<16x1xf32, #tpu.memory_space<vmem>>, vector<16x1xf32>
      %cst_13 = arith.constant dense<0xFF800000> : vector<16xf32>
      %20 = vector.multi_reduction <maximumf>, %11, %cst_13 [1] : vector<16x256xf32> to vector<16xf32>
      %21 = vector.shape_cast %20 : vector<16xf32> to vector<16x1xf32>
      %22 = arith.maximumf %19, %21 : vector<16x1xf32>
      %23 = arith.subf %19, %22 : vector<16x1xf32>
      %24 = math.exp %23 : vector<16x1xf32>
      %c0_14 = arith.constant 0 : index
      %c0_15 = arith.constant 0 : index
      %25 = vector.load %arg8[%c0_14, %c0_15] : memref<16x1xf32, #tpu.memory_space<vmem>>, vector<16x1xf32>
      %26 = arith.mulf %24, %25 : vector<16x1xf32>
      %27 = vector.broadcast %22 : vector<16x1xf32> to vector<16x256xf32>
      %28 = arith.subf %11, %27 : vector<16x256xf32>
      %29 = math.exp %28 : vector<16x256xf32>
      %cst_16 = arith.constant dense<0.000000e+00> : vector<16xf32>
      %30 = vector.multi_reduction <add>, %29, %cst_16 [1] : vector<16x256xf32> to vector<16xf32>
      %31 = vector.shape_cast %30 : vector<16xf32> to vector<16x1xf32>
      %32 = arith.addf %26, %31 : vector<16x1xf32>
      %c0_17 = arith.constant 0 : index
      %c0_18 = arith.constant 0 : index
      %33 = vector.load %arg8[%c0_17, %c0_18] : memref<16x1xf32, #tpu.memory_space<vmem>>, vector<16x1xf32>
      tpu.vector_store %arg8[%c0_17, %c0_18], %32 {strides = array<i32>} : memref<16x1xf32, #tpu.memory_space<vmem>>, vector<16x1xf32>,
      %c0_19 = arith.constant 0 : index
      %c0_20 = arith.constant 0 : index
      %34 = vector.load %arg7[%c0_19, %c0_20] : memref<16x1xf32, #tpu.memory_space<vmem>>, vector<16x1xf32>
      tpu.vector_store %arg7[%c0_19, %c0_20], %22 {strides = array<i32>} : memref<16x1xf32, #tpu.memory_space<vmem>>, vector<16x1xf32>,
      %c3_i32 = arith.constant 3 : i32
      %35 = arith.cmpi eq, %arg2, %c3_i32 : i32
      %36 = arith.extui %35 : i1 to i32
      %c0_i32_21 = arith.constant 0 : i32
      %37 = arith.cmpi ne, %36, %c0_i32_21 : i32
      scf.if %37 {
        %c0_22 = arith.constant 0 : index
        %c0_23 = arith.constant 0 : index
        %38 = vector.load %arg7[%c0_22, %c0_23] : memref<16x1xf32, #tpu.memory_space<vmem>>, vector<16x1xf32>
        %c0_24 = arith.constant 0 : index
        %c0_25 = arith.constant 0 : index
        %39 = vector.load %arg8[%c0_24, %c0_25] : memref<16x1xf32, #tpu.memory_space<vmem>>, vector<16x1xf32>
        %40 = math.log %39 : vector<16x1xf32>
        %41 = arith.addf %38, %40 : vector<16x1xf32>
        %c0_26 = arith.constant 0 : index
        %c0_27 = arith.constant 0 : index
        %42 = vector.load %arg9[%c0_26, %c0_27] : memref<16x1xf32, #tpu.memory_space<vmem>>, vector<16x1xf32>
        tpu.vector_store %arg9[%c0_26, %c0_27], %41 {strides = array<i32>} : memref<16x1xf32, #tpu.memory_space<vmem>>, vector<16x1xf32>,
      } else {
      }
    } else {
    }
    %c1_i32 = arith.constant 1 : i32
    %3 = arith.cmpi eq, %arg1, %c1_i32 : i32
    %4 = arith.extui %3 : i1 to i32
    %c0_i32_1 = arith.constant 0 : i32
    %5 = arith.cmpi ne, %4, %c0_i32_1 : i32
    scf.if %5 {
      %6 = arith.index_cast %arg2 : i32 to index
      %c0 = arith.constant 0 : index
      %c0_2 = arith.constant 0 : index
      %7 = vector.load %arg10[%6, %c0, %c0_2] : memref<4x16x256xf32, #tpu.memory_space<vmem>>, vector<1x16x256xf32>
      %8 = vector.shape_cast %7 : vector<1x16x256xf32> to vector<16x256xf32>
      %c0_3 = arith.constant 0 : index
      %c0_4 = arith.constant 0 : index
      %9 = vector.load %arg9[%c0_3, %c0_4] : memref<16x1xf32, #tpu.memory_space<vmem>>, vector<16x1xf32>
      %10 = vector.broadcast %9 : vector<16x1xf32> to vector<16x256xf32>
      %11 = arith.subf %8, %10 : vector<16x256xf32>
      %c0_5 = arith.constant 0 : index
      %c0_6 = arith.constant 0 : index
      %12 = vector.load %arg6[%c0_5, %c0_6] : memref<16x256xf32, #tpu.memory_space<vmem>>, vector<16x256xf32>
      tpu.vector_store %arg6[%c0_5, %c0_6], %11 {strides = array<i32>} : memref<16x256xf32, #tpu.memory_space<vmem>>, vector<16x256xf32>,
    } else {
    }
    return
  }
  func.func @transform_0(%arg0: i32, %arg1: i32, %arg2: i32) -> (i32, i32) {
    %c0_i32 = arith.constant 0 : i32
    %c0_i32_0 = arith.constant 0 : i32
    return %arg0, %c0_i32 : i32, i32
  }
  func.func @transform_1(%arg0: i32, %arg1: i32, %arg2: i32) -> (i32, i32) {
    %c1_i32 = arith.constant 1 : i32
    %0 = arith.subi %c1_i32, %arg1 : i32
    %1 = arith.muli %0, %arg2 : i32
    %c3_i32 = arith.constant 3 : i32
    %2 = arith.muli %arg1, %c3_i32 : i32
    %3 = arith.addi %1, %2 : i32
    %c0_i32 = arith.constant 0 : i32
    %c0_i32_0 = arith.constant 0 : i32
    return %3, %c0_i32 : i32, i32
  }
  func.func @transform_2(%arg0: i32, %arg1: i32, %arg2: i32) -> (i32, i32) {
    %c1_i32 = arith.constant 1 : i32
    %0 = arith.subi %c1_i32, %arg1 : i32
    %1 = arith.muli %0, %arg2 : i32
    %c3_i32 = arith.constant 3 : i32
    %2 = arith.muli %arg1, %c3_i32 : i32
    %3 = arith.addi %1, %2 : i32
    %c0_i32 = arith.constant 0 : i32
    %c0_i32_0 = arith.constant 0 : i32
    return %c0_i32, %3 : i32, i32
  }
  func.func @transform_3(%arg0: i32, %arg1: i32, %arg2: i32) -> (i32, i32) {
    %0 = arith.muli %arg1, %arg2 : i32
    %c0_i32 = arith.constant 0 : i32
    return %arg0, %0 : i32, i32
  }
}

</mosaic_0001>

<llo_original>
// kernel: tpu_custom_call.1
$region0: #{tpu_custom_call.1}
  #allocation0 [shape = 'u32[]', space=smem, size = 0x4, offset = 0x4, fixed_abs, tag = 'smem constant byte address 0x4 - core index']
  #allocation1 [shape = 'u32[72,128]{1,0:T(1,128)}', space=vmem, size = 0x9000, scoped, tag = 'internal scratch']
  #allocation2 [shape = 'f32[16,1]{1,0:T(8,128)}', space=vmem, size = 0x2000, scoped, tag = 'scratch operand']
  #allocation3 [shape = 'f32[16,1]{1,0:T(8,128)}', space=vmem, size = 0x2000, scoped, tag = 'scratch operand']
  #allocation4 [shape = 'f32[16,1]{1,0:T(8,128)}', space=vmem, size = 0x2000, scoped, tag = 'scratch operand']
  #allocation5 [shape = 'f32[4,16,256]{2,1,0:T(8,128)}', space=vmem, size = 0x10000, scoped, tag = 'scratch operand']
  %s0 = inlined_call_operand.vmem [shape: bf16[16,32], index: 0, kind: input, shape index: {}]
  %s1 = inlined_call_operand.vmem [shape: bf16[1024,32], index: 1, kind: input, shape index: {}]
  %s2 = inlined_call_operand.vmem [shape: f32[1,1024], index: 2, kind: input, shape index: {}]
  %s3 = inlined_call_operand.hbm [shape: f32[16,1024], index: 3, kind: output, shape index: {}]
  %s4 = sld [smem:[#allocation0]]
  $region61: #{tpu_custom_call.1} parent=0
    _
  %s6 = ssub.s32 1, %s4
  %s7 = scalar_select 0, %s6, %s4
  $region1: #{tpu_custom_call.1} parent=0
    #allocation6 [shape = 'u8[32768]{0}', space=vmem, size = 0x8000, scoped, tag = 'output window, operand 0']
    #allocation7 [shape = 's32[2]{0}', space=sflag, size = 0x8, scoped, tag = 'scoped memory for tpu_custom_call.1']
    %8 = vsyncpa [#allocation7], 0
    %s9 = scalar_lea.sflag [#allocation7], 1
    %10 = vsyncpa %s9, 0
    loop: start=0, step=1, limit=10
    $region2: #{tpu_custom_call.1} parent=1 // loop_pre_header
      _
    $region3: #{tpu_custom_call.1} parent=1 // loop_header
      %s12 = sphi 0, %s16
      %p13 = scmp.ge.s32.totalorder %s12, 10
      %s19 = sphi 0, %s38
      %s20 = sphi 0, %s34
      %s21 = sphi 0, %s30
      %s22 = sphi 0, %s19
      %s23 = sphi 0, %s20
      %s24 = sphi 0, %s21
      %s25 = sphi 0, %s22
      %s26 = sphi 0, %s23
      %s27 = sphi 0, %s24
      %s41 = sphi 0, %s43
      %s44 = sphi 0, %s41
      %s45 = sphi 0, %s44
      %s61 = sphi 0, %s45
      %s75 = sphi 0, %s77
      %s78 = sphi 0, %s75
      %s79 = sphi 0, %s78
      %s95 = sphi 0, %s79
      %s109 = sphi 0, %s111
      %s112 = sphi 0, %s109
      %s113 = sphi 0, %s112
      %s129 = sphi 0, %s113
      %s139 = sphi 0, %s141
      %s142 = sphi 0, %s139
      %s143 = sphi 0, %s142
      %s159 = sphi 0, %s143
    $region4: #{tpu_custom_call.1} parent=1 // loop_header_branch
      %15 = sbr.rel (%p13) target = $region8
    $region5: #{tpu_custom_call.1} parent=1 // loop_body
      %s17 = ssub.s32 %s12, 1
      %s18 = ssub.s32 %s12, 2
      %s28 = sadd.s32 1, %s21
      %p29 = scmp.ge.s32.totalorder %s28, 4
      %s30 = scalar_select %p29, 0, %s28
      %s31 = sadd.s32 1, %s20
      %s32 = scalar_select %p29, %s31, %s20
      %p33 = scmp.ge.s32.totalorder %s32, 2
      %s34 = scalar_select %p33, 0, %s32
      %s35 = sadd.s32 1, %s19
      %s36 = scalar_select %p33, %s35, %s19
      %p37 = scmp.ge.s32.totalorder %s36, 1
      %s38 = scalar_select %p37, 0, %s36
      %s39 = ssub.s32 %s19, %s38
      %p40 = scmp.eq.s32.totalorder %s39, 0
      %s42 = sadd.s32 %s41, 1
      %s43 = scalar_select %p40, %s41, %s42
      %p46 = pneg %p40
      %p47 = scmp.eq.s32.totalorder %s12, 7
      %p48 = por %p46, %p47
      %p49 = scmp.ne.s32.totalorder %s41, %s44
      %p50 = scmp.eq.s32.totalorder %s12, 0
      %p51 = por %p49, %p50
      %p52 = scmp.ne.s32.totalorder %s41, %s44
      %p53 = scmp.eq.s32.totalorder %s17, 7
      %p54 = por %p52, %p53
      %p55 = scmp.ne.s32.totalorder %s44, %s45
      %p56 = scmp.eq.s32.totalorder %s17, 0
      %p57 = por %p55, %p56
      %p58 = scmp.ne.s32.totalorder %s44, %s45
      %p59 = scmp.eq.s32.totalorder %s18, 7
      %p60 = por %p58, %p59
      %p62 = scmp.ne.s32.totalorder %s45, %s61
      %p63 = scmp.eq.s32.totalorder %s18, 0
      %p64 = por %p62, %p63
      %s65 = ssub.s32 1, %s20
      %s66 = smul.u32 %s65, %s21
      %s67 = smul.u32 %s20, 3
      %s68 = sadd.s32 %s66, %s67
      %s69 = ssub.s32 1, %s34
      %s70 = smul.u32 %s69, %s30
      %s71 = smul.u32 %s34, 3
      %s72 = sadd.s32 %s70, %s71
      %s73 = ssub.s32 %s68, %s72
      %p74 = scmp.eq.s32.totalorder %s73, 0
      %s76 = sadd.s32 %s75, 1
      %s77 = scalar_select %p74, %s75, %s76
      %p80 = pneg %p74
      %p81 = scmp.eq.s32.totalorder %s12, 7
      %p82 = por %p80, %p81
      %p83 = scmp.ne.s32.totalorder %s75, %s78
      %p84 = scmp.eq.s32.totalorder %s12, 0
      %p85 = por %p83, %p84
      %p86 = scmp.ne.s32.totalorder %s75, %s78
      %p87 = scmp.eq.s32.totalorder %s17, 7
      %p88 = por %p86, %p87
      %p89 = scmp.ne.s32.totalorder %s78, %s79
      %p90 = scmp.eq.s32.totalorder %s17, 0
      %p91 = por %p89, %p90
      %p92 = scmp.ne.s32.totalorder %s78, %s79
      %p93 = scmp.eq.s32.totalorder %s18, 7
      %p94 = por %p92, %p93
      %p96 = scmp.ne.s32.totalorder %s79, %s95
      %p97 = scmp.eq.s32.totalorder %s18, 0
      %p98 = por %p96, %p97
      %s99 = ssub.s32 1, %s20
      %s100 = smul.u32 %s99, %s21
      %s101 = smul.u32 %s20, 3
      %s102 = sadd.s32 %s100, %s101
      %s103 = ssub.s32 1, %s34
      %s104 = smul.u32 %s103, %s30
      %s105 = smul.u32 %s34, 3
      %s106 = sadd.s32 %s104, %s105
      %s107 = ssub.s32 %s102, %s106
      %p108 = scmp.eq.s32.totalorder %s107, 0
      %s110 = sadd.s32 %s109, 1
      %s111 = scalar_select %p108, %s109, %s110
      %p114 = pneg %p108
      %p115 = scmp.eq.s32.totalorder %s12, 7
      %p116 = por %p114, %p115
      %p117 = scmp.ne.s32.totalorder %s109, %s112
      %p118 = scmp.eq.s32.totalorder %s12, 0
      %p119 = por %p117, %p118
      %p120 = scmp.ne.s32.totalorder %s109, %s112
      %p121 = scmp.eq.s32.totalorder %s17, 7
      %p122 = por %p120, %p121
      %p123 = scmp.ne.s32.totalorder %s112, %s113
      %p124 = scmp.eq.s32.totalorder %s17, 0
      %p125 = por %p123, %p124
      %p126 = scmp.ne.s32.totalorder %s112, %s113
      %p127 = scmp.eq.s32.totalorder %s18, 7
      %p128 = por %p126, %p127
      %p130 = scmp.ne.s32.totalorder %s113, %s129
      %p131 = scmp.eq.s32.totalorder %s18, 0
      %p132 = por %p130, %p131
      %s133 = smul.u32 %s20, %s21
      %s134 = smul.u32 %s34, %s30
      %s135 = ssub.s32 %s19, %s38
      %s136 = ssub.s32 %s133, %s134
      %s137 = sor.u32 %s135, %s136
      %p138 = scmp.eq.s32.totalorder %s137, 0
      %s140 = sadd.s32 %s139, 1
      %s141 = scalar_select %p138, %s139, %s140
      %p144 = pneg %p138
      %p145 = scmp.eq.s32.totalorder %s12, 7
      %p146 = por %p144, %p145
      %p147 = scmp.ne.s32.totalorder %s139, %s142
      %p148 = scmp.eq.s32.totalorder %s12, 0
      %p149 = por %p147, %p148
      %p150 = scmp.ne.s32.totalorder %s139, %s142
      %p151 = scmp.eq.s32.totalorder %s17, 7
      %p152 = por %p150, %p151
      %p153 = scmp.ne.s32.totalorder %s142, %s143
      %p154 = scmp.eq.s32.totalorder %s17, 0
      %p155 = por %p153, %p154
      %p156 = scmp.ne.s32.totalorder %s142, %s143
      %p157 = scmp.eq.s32.totalorder %s18, 7
      %p158 = por %p156, %p157
      %p160 = scmp.ne.s32.totalorder %s143, %s159
      %p161 = scmp.eq.s32.totalorder %s18, 0
      %p162 = por %p160, %p161
      %p163 = scmp.le.s32.totalorder 1, %s12
      %p164 = scmp.lt.s32.totalorder %s12, 9
      %p165 = pnand %p163, %p164
      %p166 = pneg %p165
      // Predicated region
      $region9: #{tpu_custom_call.1} parent=5 // pred_check
        _
      $region10: #{tpu_custom_call.1} parent=5 // pred_check_branch
        %168 = sbr.rel (%p165) target = $region12
      $region11: #{tpu_custom_call.1} parent=5 // pred_region
        %s169 = ssub.s32 %s12, 1
        // Predicated region
        $region13: #{tpu_custom_call.1} parent=11 // pred_check
          %p170 = pneg %p57
        $region14: #{tpu_custom_call.1} parent=11 // pred_check_branch
          %172 = sbr.rel (%p170) target = $region16
        $region15: #{tpu_custom_call.1} parent=11 // pred_region
          %s173 = smul.u32 2, %s22
          %p174 = scmp.lt.s32.totalorder %s173, 1
          %s175 = scalar_select %p174, %s173, 1
          %s176 = smul.addr %s175, 4
          %s177 = scalar_lea.vmem %s0, %s176
          %s178 = smul.u32 2, %s22
        $region16: #{tpu_custom_call.1} parent=11 // pred_fallthru
          _
      $region12: #{tpu_custom_call.1} parent=5 // pred_fallthru
        _
      %p179 = scmp.lt.s32.totalorder %s12, 8
      // Predicated region
      $region17: #{tpu_custom_call.1} parent=5 // pred_check
        %p180 = pneg %p179
      $region18: #{tpu_custom_call.1} parent=5 // pred_check_branch
        %182 = sbr.rel (%p180) target = $region20
      $region19: #{tpu_custom_call.1} parent=5 // pred_region
        // Predicated region
        $region21: #{tpu_custom_call.1} parent=19 // pred_check
          %p183 = pneg %p85
        $region22: #{tpu_custom_call.1} parent=19 // pred_check_branch
          %185 = sbr.rel (%p183) target = $region24
        $region23: #{tpu_custom_call.1} parent=19 // pred_region
          %s186 = ssub.s32 1, %s20
          %s187 = smul.u32 %s186, %s21
          %s188 = smul.u32 %s20, 3
          %s189 = sadd.s32 %s187, %s188
          %s190 = smul.u32 32, %s189
          %p191 = scmp.lt.s32.totalorder %s190, 127
          %s192 = scalar_select %p191, %s190, 127
          %s193 = smul.addr %s192, 4
          %s194 = scalar_lea.vmem %s1, %s193
          %s195 = ssub.s32 1, %s20
          %s196 = smul.u32 %s195, %s21
          %s197 = smul.u32 %s20, 3
          %s198 = sadd.s32 %s196, %s197
          %s199 = smul.u32 32, %s198
        $region24: #{tpu_custom_call.1} parent=19 // pred_fallthru
          _
        // Predicated region
        $region25: #{tpu_custom_call.1} parent=19 // pred_check
          %p200 = pneg %p119
        $region26: #{tpu_custom_call.1} parent=19 // pred_check_branch
          %202 = sbr.rel (%p200) target = $region28
        $region27: #{tpu_custom_call.1} parent=19 // pred_region
          %s203 = ssub.s32 1, %s20
          %s204 = smul.u32 %s203, %s21
          %s205 = smul.u32 %s20, 3
          %s206 = sadd.s32 %s204, %s205
          %s207 = smul.u32 2, %s206
          %p208 = scmp.lt.s32.totalorder %s207, 7
          %s209 = scalar_select %p208, %s207, 7
          %s210 = scalar_lea.vmem %s2, %s209
          %s211 = ssub.s32 1, %s20
          %s212 = smul.u32 %s211, %s21
          %s213 = smul.u32 %s20, 3
          %s214 = sadd.s32 %s212, %s213
          %s215 = smul.u32 2, %s214
        $region28: #{tpu_custom_call.1} parent=19 // pred_fallthru
          _
      $region20: #{tpu_custom_call.1} parent=5 // pred_fallthru
        _
      %p216 = scmp.le.s32.totalorder 1, %s12
      %p217 = scmp.lt.s32.totalorder %s12, 9
      %p218 = pnand %p216, %p217
      %p219 = pneg %p218
      // Predicated region
      $region29: #{tpu_custom_call.1} parent=5 // pred_check
        _
      $region30: #{tpu_custom_call.1} parent=5 // pred_check_branch
        %221 = sbr.rel (%p218) target = $region32
      $region31: #{tpu_custom_call.1} parent=5 // pred_region
        %s222 = ssub.s32 %s12, 1
        %s223 = smul.u32 2, %s22
        %p224 = scmp.lt.s32.totalorder %s223, 1
        %s225 = scalar_select %p224, %s223, 1
        %s226 = smul.addr %s225, 4
        %s227 = scalar_lea.vmem %s0, %s226
        %p228 = pneg %p57
        %p229 = pneg %p54
        %s230 = ssub.s32 1, %s23
        %s231 = smul.u32 %s230, %s24
        %s232 = smul.u32 %s23, 3
        %s233 = sadd.s32 %s231, %s232
        %s234 = smul.u32 32, %s233
        %p235 = scmp.lt.s32.totalorder %s234, 127
        %s236 = scalar_select %p235, %s234, 127
        %s237 = smul.addr %s236, 4
        %s238 = scalar_lea.vmem %s1, %s237
        %p239 = pneg %p91
        %p240 = pneg %p88
        %s241 = ssub.s32 1, %s23
        %s242 = smul.u32 %s241, %s24
        %s243 = smul.u32 %s23, 3
        %s244 = sadd.s32 %s242, %s243
        %s245 = smul.u32 2, %s244
        %p246 = scmp.lt.s32.totalorder %s245, 7
        %s247 = scalar_select %p246, %s245, 7
        %s248 = scalar_lea.vmem %s2, %s247
        %p249 = pneg %p125
        %p250 = pneg %p122
        %p251 = pneg %p155
        %p252 = pneg %p152
        %s253 = sand.u32 %s142, 1
        %s254 = scalar_lea.sflag [#allocation7], %s253
        %s255 = sand.u32 %s142, 1
        %s256 = smul.addr %s255, 32
        %s257 = scalar_lea.vmem [#allocation6], %s256
        %s258 = smul.u32 2, %s22
        %p259 = scmp.lt.s32.totalorder %s258, 1
        %s260 = scalar_select %p259, %s258, 1
        %s261 = smul.addr %s260, 4
        %s262 = scalar_lea.vmem %s0, %s261
        %s263 = smul.u32 2, %s22
        %s264 = ssub.s32 1, %s23
        %s265 = smul.u32 %s264, %s24
        %s266 = smul.u32 %s23, 3
        %s267 = sadd.s32 %s265, %s266
        %s268 = smul.u32 32, %s267
        %p269 = scmp.lt.s32.totalorder %s268, 127
        %s270 = scalar_select %p269, %s268, 127
        %s271 = smul.addr %s270, 4
        %s272 = scalar_lea.vmem %s1, %s271
        %s273 = ssub.s32 1, %s23
        %s274 = smul.u32 %s273, %s24
        %s275 = smul.u32 %s23, 3
        %s276 = sadd.s32 %s274, %s275
        %s277 = smul.u32 32, %s276
        %s278 = ssub.s32 1, %s23
        %s279 = smul.u32 %s278, %s24
        %s280 = smul.u32 %s23, 3
        %s281 = sadd.s32 %s279, %s280
        %s282 = smul.u32 2, %s281
        %p283 = scmp.lt.s32.totalorder %s282, 7
        %s284 = scalar_select %p283, %s282, 7
        %s285 = scalar_lea.vmem %s2, %s284
        %s286 = ssub.s32 1, %s23
        %s287 = smul.u32 %s286, %s24
        %s288 = smul.u32 %s23, 3
        %s289 = sadd.s32 %s287, %s288
        %s290 = smul.u32 2, %s289
        %s291 = smul.u32 %s23, %s24
        %s292 = smul.u32 2, %s22
        %s293 = smul.u32 2, %s291
        %p294 = scmp.eq.s32.totalorder %s23, 0
        // Predicated region
        $region33: #{tpu_custom_call.1} parent=31 // pred_check
          %p295 = pneg %p294
        $region34: #{tpu_custom_call.1} parent=31 // pred_check_branch
          %297 = sbr.rel (%p295) target = $region36
        $region35: #{tpu_custom_call.1} parent=31 // pred_region
          %v298 = vld [vmem:[%s262] sm:$0xf]
          %v299 = vld [vmem:[%s262 + $0x4] sm:$0xf]
          %v300 = vld [vmem:[%s272] sm:$0xf]
          %v301 = vld [vmem:[%s272 + $0x4] sm:$0xf]
          %v302 = vld [vmem:[%s272 + $0x8] sm:$0xf]
          %v303 = vld [vmem:[%s272 + $0xc] sm:$0xf]
          %v304 = vld [vmem:[%s272 + $0x10] sm:$0xf]
          %v305 = vld [vmem:[%s272 + $0x14] sm:$0xf]
          %v306 = vld [vmem:[%s272 + $0x18] sm:$0xf]
          %v307 = vld [vmem:[%s272 + $0x1c] sm:$0xf]
          %v308 = vld [vmem:[%s272 + $0x20] sm:$0xf]
          %v309 = vld [vmem:[%s272 + $0x24] sm:$0xf]
          %v310 = vld [vmem:[%s272 + $0x28] sm:$0xf]
          %v311 = vld [vmem:[%s272 + $0x2c] sm:$0xf]
          %v312 = vld [vmem:[%s272 + $0x30] sm:$0xf]
          %v313 = vld [vmem:[%s272 + $0x34] sm:$0xf]
          %v314 = vld [vmem:[%s272 + $0x38] sm:$0xf]
          %v315 = vld [vmem:[%s272 + $0x3c] sm:$0xf]
          %v316 = vld [vmem:[%s272 + $0x40] sm:$0xf]
          %v317 = vld [vmem:[%s272 + $0x44] sm:$0xf]
          %v318 = vld [vmem:[%s272 + $0x48] sm:$0xf]
          %v319 = vld [vmem:[%s272 + $0x4c] sm:$0xf]
          %v320 = vld [vmem:[%s272 + $0x50] sm:$0xf]
          %v321 = vld [vmem:[%s272 + $0x54] sm:$0xf]
          %v322 = vld [vmem:[%s272 + $0x58] sm:$0xf]
          %v323 = vld [vmem:[%s272 + $0x5c] sm:$0xf]
          %v324 = vld [vmem:[%s272 + $0x60] sm:$0xf]
          %v325 = vld [vmem:[%s272 + $0x64] sm:$0xf]
          %v326 = vld [vmem:[%s272 + $0x68] sm:$0xf]
          %v327 = vld [vmem:[%s272 + $0x6c] sm:$0xf]
          %v328 = vld [vmem:[%s272 + $0x70] sm:$0xf]
          %v329 = vld [vmem:[%s272 + $0x74] sm:$0xf]
          %v330 = vld [vmem:[%s272 + $0x78] sm:$0xf]
          %v331 = vld [vmem:[%s272 + $0x7c] sm:$0xf]
          %v332 = vld [vmem:[%s285] sm:$0x3]
          %v334 = vperm.slane %v332, 0
          %v335 = vperm.slane %v332, 1
          %v340 = vunpack.c.l.b16 %v298
          %v341 = vunpack.c.l.b16 %v299
          %v342 = vpack.c.b16 %v341, %v340
          %v375 = vunpack.c.l.b16 %v300
          %v376 = vunpack.c.l.b16 %v301
          %v377 = vunpack.c.l.b16 %v302
          %v378 = vunpack.c.l.b16 %v303
          %v379 = vunpack.c.l.b16 %v304
          %v380 = vunpack.c.l.b16 %v305
          %v381 = vunpack.c.l.b16 %v306
          %v382 = vunpack.c.l.b16 %v307
          %v383 = vunpack.c.l.b16 %v308
          %v384 = vunpack.c.l.b16 %v309
          %v385 = vunpack.c.l.b16 %v310
          %v386 = vunpack.c.l.b16 %v311
          %v387 = vunpack.c.l.b16 %v312
          %v388 = vunpack.c.l.b16 %v313
          %v389 = vunpack.c.l.b16 %v314
          %v390 = vunpack.c.l.b16 %v315
          %v391 = vunpack.c.l.b16 %v316
          %v392 = vunpack.c.l.b16 %v317
          %v393 = vunpack.c.l.b16 %v318
          %v394 = vunpack.c.l.b16 %v319
          %v395 = vunpack.c.l.b16 %v320
          %v396 = vunpack.c.l.b16 %v321
          %v397 = vunpack.c.l.b16 %v322
          %v398 = vunpack.c.l.b16 %v323
          %v399 = vunpack.c.l.b16 %v324
          %v400 = vunpack.c.l.b16 %v325
          %v401 = vunpack.c.l.b16 %v326
          %v402 = vunpack.c.l.b16 %v327
          %v403 = vunpack.c.l.b16 %v328
          %v404 = vunpack.c.l.b16 %v329
          %v405 = vunpack.c.l.b16 %v330
          %v406 = vunpack.c.l.b16 %v331
          %v407 = vpack.c.b16 %v376, %v375
          %v408 = vpack.c.b16 %v378, %v377
          %v409 = vpack.c.b16 %v380, %v379
          %v410 = vpack.c.b16 %v382, %v381
          %v411 = vpack.c.b16 %v384, %v383
          %v412 = vpack.c.b16 %v386, %v385
          %v413 = vpack.c.b16 %v388, %v387
          %v414 = vpack.c.b16 %v390, %v389
          %v415 = vpack.c.b16 %v392, %v391
          %v416 = vpack.c.b16 %v394, %v393
          %v417 = vpack.c.b16 %v396, %v395
          %v418 = vpack.c.b16 %v398, %v397
          %v419 = vpack.c.b16 %v400, %v399
          %v420 = vpack.c.b16 %v402, %v401
          %v421 = vpack.c.b16 %v404, %v403
          %v422 = vpack.c.b16 %v406, %v405
          %vm423 = vcmask 261120
          %v425 = vsel %vm423, %v342, 0
          %v428 = vsel %vm423, %v407, 0
          %v431 = vsel %vm423, %v408, 0
          %v434 = vsel %vm423, %v409, 0
          %v437 = vsel %vm423, %v410, 0
          %v440 = vsel %vm423, %v411, 0
          %v443 = vsel %vm423, %v412, 0
          %v446 = vsel %vm423, %v413, 0
          %v449 = vsel %vm423, %v414, 0
          %v452 = vsel %vm423, %v415, 0
          %v455 = vsel %vm423, %v416, 0
          %v458 = vsel %vm423, %v417, 0
          %v461 = vsel %vm423, %v418, 0
          %v464 = vsel %vm423, %v419, 0
          %v467 = vsel %vm423, %v420, 0
          %v470 = vsel %vm423, %v421, 0
          %v473 = vsel %vm423, %v422, 0
          %475 = vmatpush.bf16.xpose.msra.mxu0 %v449
          %476 = vmatpush.bf16.xpose.msra.mxu0 %v446
          %477 = vmatpush.bf16.xpose.msra.mxu0 %v443
          %478 = vmatpush.bf16.xpose.msra.mxu0 %v440
          %479 = vmatpush.bf16.xpose.msra.mxu0 %v437
          %480 = vmatpush.bf16.xpose.msra.mxu0 %v434
          %481 = vmatpush.bf16.xpose.msra.mxu0 %v431
          %482 = vmatpush.bf16.xpose.msra.mxu0 %v428
          %483 = vmatmul.bf16.gmra.mxu0 %v425
          %v484 = vpop.f32.mrf.mxu0
          %v485 = vadd.f32 %v334, %v484
          %v486 = vpop.f32.mrf.mxu0
          %v487 = vadd.f32 %v334, %v486
          %488 = vdwg.mxu0
          %489 = vmatpush.bf16.xpose.msra.mxu0 %v473
          %490 = vmatpush.bf16.xpose.msra.mxu0 %v470
          %491 = vmatpush.bf16.xpose.msra.mxu0 %v467
          %492 = vmatpush.bf16.xpose.msra.mxu0 %v464
          %493 = vmatpush.bf16.xpose.msra.mxu0 %v461
          %494 = vmatpush.bf16.xpose.msra.mxu0 %v458
          %495 = vmatpush.bf16.xpose.msra.mxu0 %v455
          %496 = vmatpush.bf16.xpose.msra.mxu0 %v452
          %497 = vmatmul.bf16.gmra.mxu0 %v425
          %v498 = vpop.f32.mrf.mxu0
          %v499 = vadd.f32 %v335, %v498
          %v500 = vpop.f32.mrf.mxu0
          %v501 = vadd.f32 %v335, %v500
          %502 = vdwg.mxu0
          %s503 = smul.u32 %s24, 4
          %s504 = smul.addr %s503, 8
          %s505 = scalar_lea.vmem [#allocation5], %s504
          %506 = vst [vmem:[%s505] sm:$0xff] %v485
          %507 = vst [vmem:[%s505 + $0x8] sm:$0xff] %v499
          %508 = vst [vmem:[%s505 + $0x10] sm:$0xff] %v487
          %509 = vst [vmem:[%s505 + $0x18] sm:$0xff] %v501
          %p510 = scmp.eq.s32.totalorder %s24, 0
          // Predicated region
          $region37: #{tpu_custom_call.1} parent=35 // pred_check
            %p511 = pneg %p510
          $region38: #{tpu_custom_call.1} parent=35 // pred_check_branch
            %513 = sbr.rel (%p511) target = $region40
          $region39: #{tpu_custom_call.1} parent=35 // pred_region
            %vm514 = vcmask 7168
            %515 = vst.msk [vmem:[#allocation2] sm:$0xff] %vm514, -inf
            %516 = vst.msk [vmem:[#allocation2 + $0x8] sm:$0xff] %vm514, -inf
            %517 = vst.msk [vmem:[#allocation3] sm:$0xff] %vm514, 0.0
            %518 = vst.msk [vmem:[#allocation3 + $0x8] sm:$0xff] %vm514, 0.0
          $region40: #{tpu_custom_call.1} parent=35 // pred_fallthru
            _
          %v519 = vld [vmem:[#allocation2] sm:$0xff]
          %v520 = vld [vmem:[#allocation2 + $0x8] sm:$0xff]
          %v521 = vmax.f32 %v485, %v499
          %522 = vmax.xlane.f32.xlu0 %v521
          %v523 = vpop.xlane.xlu0 %522
          %v524 = vmax.f32 %v487, %v501
          %525 = vmax.xlane.f32.xlu0 %v524
          %v526 = vpop.xlane.xlu0 %525
          %v527 = vmax.f32 %v519, %v523
          %v528 = vmax.f32 %v520, %v526
          %v529 = vsub.f32 %v519, %v527
          %v530 = vsub.f32 %v520, %v528
          %v531 = vmul.f32 %v529, 1.442695
          %v532 = vpow.pop %v531
          %v533 = vmul.f32 %v530, 1.442695
          %v534 = vpow.pop %v533
          %v535 = vld [vmem:[#allocation3] sm:$0xff]
          %v536 = vld [vmem:[#allocation3 + $0x8] sm:$0xff]
          %v537 = vmul.f32 %v532, %v535
          %v538 = vmul.f32 %v534, %v536
          %540 = vset.pattern.permute.xlu0 0
          %541 = vperm.xlu0 %540, %v527
          %v542 = vpop.permute.xlu0 %541
          %545 = vset.pattern.permute.xlu0 0
          %546 = vperm.xlu0 %545, %v528
          %v547 = vpop.permute.xlu0 %546
          %v549 = vsub.f32 %v485, %v542
          %v550 = vsub.f32 %v499, %v542
          %v551 = vsub.f32 %v487, %v547
          %v552 = vsub.f32 %v501, %v547
          %v553 = vmul.f32 %v549, 1.442695
          %v554 = vpow.pop %v553
          %v555 = vmul.f32 %v550, 1.442695
          %v556 = vpow.pop %v555
          %v557 = vmul.f32 %v551, 1.442695
          %v558 = vpow.pop %v557
          %v559 = vmul.f32 %v552, 1.442695
          %v560 = vpow.pop %v559
          %v561 = vadd.f32 %v554, %v556
          %562 = vadd.xlane.f32.xlu0 %v561
          %v563 = vpop.xlane.xlu0 %562
          %v564 = vadd.f32 %v558, %v560
          %565 = vadd.xlane.f32.xlu0 %v564
          %v566 = vpop.xlane.xlu0 %565
          %v567 = vadd.f32 %v537, %v563
          %v568 = vadd.f32 %v538, %v566
          %vm569 = vcmask 7168
          %570 = vst.msk [vmem:[#allocation3] sm:$0xff] %vm569, %v567
          %571 = vst.msk [vmem:[#allocation3 + $0x8] sm:$0xff] %vm569, %v568
          %572 = vst.msk [vmem:[#allocation2] sm:$0xff] %vm569, %v527
          %573 = vst.msk [vmem:[#allocation2 + $0x8] sm:$0xff] %vm569, %v528
          %p574 = scmp.eq.s32.totalorder %s24, 3
          // Predicated region
          $region41: #{tpu_custom_call.1} parent=35 // pred_check
            %p575 = pneg %p574
          $region42: #{tpu_custom_call.1} parent=35 // pred_check_branch
            %577 = sbr.rel (%p575) target = $region44
          $region43: #{tpu_custom_call.1} parent=35 // pred_region
            %v578 = vld [vmem:[#allocation2] sm:$0xff]
            %v579 = vld [vmem:[#allocation2 + $0x8] sm:$0xff]
            %v580 = vld [vmem:[#allocation3] sm:$0xff]
            %v581 = vld [vmem:[#allocation3 + $0x8] sm:$0xff]
            %v582 = vlog2.pop %v580
            %v583 = vmul.f32 %v582, 0.6931472
            %v584 = vlog2.pop %v581
            %v585 = vmul.f32 %v584, 0.6931472
            %v586 = vadd.f32 %v578, %v583
            %v587 = vadd.f32 %v579, %v585
            %588 = vst.msk [vmem:[#allocation4] sm:$0xff] %vm569, %v586
            %589 = vst.msk [vmem:[#allocation4 + $0x8] sm:$0xff] %vm569, %v587
          $region44: #{tpu_custom_call.1} parent=35 // pred_fallthru
            _
        $region36: #{tpu_custom_call.1} parent=31 // pred_fallthru
          _
        %p590 = scmp.eq.s32.totalorder %s23, 1
        // Predicated region
        $region45: #{tpu_custom_call.1} parent=31 // pred_check
          %p591 = pneg %p590
        $region46: #{tpu_custom_call.1} parent=31 // pred_check_branch
          %593 = sbr.rel (%p591) target = $region48
        $region47: #{tpu_custom_call.1} parent=31 // pred_region
          %s594 = smul.u32 %s24, 4
          %s595 = smul.addr %s594, 8
          %s596 = scalar_lea.vmem [#allocation5], %s595
          %v597 = vld [vmem:[%s596] sm:$0xff]
          %v598 = vld [vmem:[%s596 + $0x8] sm:$0xff]
          %v599 = vld [vmem:[%s596 + $0x10] sm:$0xff]
          %v600 = vld [vmem:[%s596 + $0x18] sm:$0xff]
          %v601 = vld [vmem:[#allocation4] sm:$0xff]
          %v602 = vld [vmem:[#allocation4 + $0x8] sm:$0xff]
          %604 = vset.pattern.permute.xlu0 0
          %605 = vperm.xlu0 %604, %v601
          %v606 = vpop.permute.xlu0 %605
          %609 = vset.pattern.permute.xlu0 0
          %610 = vperm.xlu0 %609, %v602
          %v611 = vpop.permute.xlu0 %610
          %v613 = vsub.f32 %v597, %v606
          %v614 = vsub.f32 %v598, %v606
          %v615 = vsub.f32 %v599, %v611
          %v616 = vsub.f32 %v600, %v611
          %617 = vst [vmem:[%s257] sm:$0xff] %v613
          %618 = vst [vmem:[%s257 + $0x8] sm:$0xff] %v614
          %619 = vst [vmem:[%s257 + $0x10] sm:$0xff] %v615
          %620 = vst [vmem:[%s257 + $0x18] sm:$0xff] %v616
        $region48: #{tpu_custom_call.1} parent=31 // pred_fallthru
          _
        %s621 = sand.u32 %s142, 1
        %s622 = scalar_lea.sflag [#allocation7], %s621
        %s623 = sand.u32 %s142, 1
        %s624 = smul.addr %s623, 32
        %s625 = scalar_lea.vmem [#allocation6], %s624
        // Predicated region
        $region49: #{tpu_custom_call.1} parent=31 // pred_check
          %p626 = pneg %p152
        $region50: #{tpu_custom_call.1} parent=31 // pred_check_branch
          %628 = sbr.rel (%p626) target = $region52
        $region51: #{tpu_custom_call.1} parent=31 // pred_region
          %s629 = smul.u32 %s23, %s24
          %s630 = smul.u32 2, %s22
          %s631 = smul.u32 2, %s629
          %633 = vsyncadd %s622, 0
          %s634 = smul.addr %s630, 8
          %s635 = sadd.s32 %s631, %s634
          %s636 = smul.addr %s635, 8
          %s637 = scalar_lea.hbm %s3, %s636
          %s638 = sshll.u32 %s625, 4
          %s639 = int_to_ptr.vmem [resolvable:$true] %s638
          %s640 = sshll.u32 %s637, 4
          %s641 = int_to_ptr.hbm [resolvable:$true] %s640
          %646 = dma.vmem_to_hbm [thread:$0]  %s639, 512, %s641, %s622, 256, 1024, 16
        $region52: #{tpu_custom_call.1} parent=31 // pred_fallthru
          _
      $region32: #{tpu_custom_call.1} parent=5 // pred_fallthru
        _
      %p647 = scmp.le.s32.totalorder 2, %s12
      // Predicated region
      $region53: #{tpu_custom_call.1} parent=5 // pred_check
        %p648 = pneg %p647
      $region54: #{tpu_custom_call.1} parent=5 // pred_check_branch
        %650 = sbr.rel (%p648) target = $region56
      $region55: #{tpu_custom_call.1} parent=5 // pred_region
        %s651 = ssub.s32 %s12, 2
        // Predicated region
        $region57: #{tpu_custom_call.1} parent=55 // pred_check
          %p652 = pneg %p158
        $region58: #{tpu_custom_call.1} parent=55 // pred_check_branch
          %654 = sbr.rel (%p652) target = $region60
        $region59: #{tpu_custom_call.1} parent=55 // pred_region
          %s655 = sand.u32 %s143, 1
          %s656 = scalar_lea.sflag [#allocation7], %s655
          %s657 = sand.u32 %s143, 1
          %s658 = smul.addr %s657, 32
          %s659 = scalar_lea.vmem [#allocation6], %s658
          %661 = dma.done %s656, 512
        $region60: #{tpu_custom_call.1} parent=55 // pred_fallthru
          _
      $region56: #{tpu_custom_call.1} parent=5 // pred_fallthru
        _
    $region6: #{tpu_custom_call.1} parent=1 // loop_footer
      %s16 = sadd.s32 1, %s12
    $region7: #{tpu_custom_call.1} parent=1 // loop_footer_branch
      %11 = sbr.rel target = $region3
    $region8: #{tpu_custom_call.1} parent=1 // loop_exit
      _
    %662 = vsyncpa [#allocation7], 1
    %s663 = scalar_lea.sflag [#allocation7], 1
    %664 = vsyncpa %s663, 1

</llo_original>
